<compile_context>
chip_gen: v7x
topology: tpu7x:2x2x1
jax: 0.10.0
libtpu: 0.0.40
codegen_flags: <defaults>
</compile_context>

<pallas_src>
import jax
import jax.numpy as jnp
from jax.experimental import pallas as pl
from jax.experimental.pallas import tpu as pltpu


def _round_up(x, m):
    return ((x + m - 1) // m) * m


_NEG_BIG = -1e30  # padded-class bias: real max dominates, exp underflows to 0


def _vmem_and_mxu_info():
    """(vmem_capacity_bytes, mxu_align) for the attached TPU, with safe fallbacks."""
    vmem_cap = 64 * 1024 * 1024   # conservative default = v7x per-TC VMEM
    try:  # hardware probe only; any failure just means conservative defaults
        cap = getattr(pltpu.get_tpu_info(), "vmem_capacity_bytes", None)
        if cap:
            vmem_cap = int(cap)
    except Exception:
        pass
    mxu_align = 128               # v5e / older: 128x128 MXU tiles
    try:
        kind = jax.devices()[0].device_kind.lower()
        if "v6" in kind or "7" in kind:
            mxu_align = 256       # v6e / v7x: 256x256 MXU
    except Exception:
        pass
    return vmem_cap, mxu_align


def prepare_my_linear_params(weight, bias, *, mxu_dtype=jnp.bfloat16):
    """One-time (module-init) packing of nn.Linear params for the kernel.

    weight: (C, H) torch nn.Linear layout; bias: (C,).
    Returns (w_t, b_pad): weight transposed to (H, C_pad) in the MXU operand
    dtype with zero-padded extra class columns, and the f32 bias padded with a
    large negative so padded logits never influence the log-softmax.
    """
    C, H = weight.shape
    C_pad = _round_up(max(C, 1), 128)                 # lane-dense class axis
    w_t = jnp.zeros((H, C_pad), mxu_dtype).at[:, :C].set(weight.T.astype(mxu_dtype))
    b_pad = jnp.full((1, C_pad), _NEG_BIG, jnp.float32).at[0, :C].set(
        bias.astype(jnp.float32))
    return w_t, b_pad


def _linear_logsoftmax_kernel(x_ref, w_ref, b_ref, o_ref):
    # Cast the row tile to the MXU operand dtype in-kernel (VPU op, hidden
    # under the MXU) -- x crosses HBM->VMEM once in its original dtype.
    x = x_ref[...].astype(w_ref.dtype)
    # logits = x @ W^T + b ; W pre-transposed to (H, C_pad), bias (1, C_pad);
    # f32 accumulation on the MXU.
    logits = jnp.dot(x, w_ref[...], preferred_element_type=jnp.float32) + b_ref[...]
    # Numerically stable log_softmax over the lane-dense padded class axis.
    # Padded columns carry a -1e30 bias so exp(shifted) underflows to 0 there.
    # Epilogue stays f32 (v5e VPU/EUP have no bf16 path; exp goes to the EUP).
    m = jnp.max(logits, axis=-1, keepdims=True)
    shifted = logits - m
    lse = jnp.log(jnp.sum(jnp.exp(shifted), axis=-1, keepdims=True))
    o_ref[...] = (shifted - lse).astype(o_ref.dtype)


def my_linear_forward(x, w_t, b_pad, *, num_classes, max_tm=1024):
    """Forward of MyLinear: log_softmax(x @ weight.T + bias, axis=1).

    x: (N, H); (w_t, b_pad) from prepare_my_linear_params(); num_classes = C.
    """
    N, H = x.shape
    Hw, C_pad = w_t.shape
    assert Hw == H and C_pad % 128 == 0 and num_classes <= C_pad
    out_dtype = x.dtype

    vmem_cap, mxu_align = _vmem_and_mxu_info()
    if vmem_cap <= 80 * 1024 * 1024:
        # v7x-class: 64 MiB VMEM per TC, 2 TCs share the grid -> >=2 steps/TC.
        budget, limit_cap, min_steps = 26 << 20, 48 << 20, 4
    else:
        # v5e / v6e: 128 MiB VMEM, single TC -> bigger tiles, >=2 steps total.
        budget, limit_cap, min_steps = 72 << 20, 100 << 20, 2

    x_bytes = jnp.dtype(x.dtype).itemsize
    w_bytes = jnp.dtype(w_t.dtype).itemsize
    out_bytes = jnp.dtype(out_dtype).itemsize

    def vmem_estimate(tm_, weight_buffers):
        x_tile = 2 * tm_ * H * x_bytes                 # x tile, double-buffered
        out_tile = 2 * tm_ * C_pad * out_bytes         # out tile, double-buffered
        w_res = weight_buffers * H * C_pad * w_bytes   # resident weight
        b_res = weight_buffers * C_pad * 4             # resident bias
        interm = 3 * tm_ * C_pad * 4                   # f32 logits/shifted/exp temps
        return x_tile + out_tile + w_res + b_res + interm

    # Row tile: largest multiple of 8 that fits the budget, clamped so the grid
    # keeps >= min_steps steps when N allows, then snapped to an MXU-friendly
    # multiple (256 on v6e/v7x, 128 on v5e) when large enough.
    tm = min(max_tm, _round_up(N, 8))
    if N >= min_steps * 8:
        tm = min(tm, _round_up(pl.cdiv(N, min_steps), 8))
    while tm > 8 and vmem_estimate(tm, 1) > budget:
        tm = max(8, _round_up(tm // 2, 8))
    if tm >= 2 * mxu_align:
        tm = (tm // mxu_align) * mxu_align
    elif tm >= 256:
        tm = (tm // 128) * 128

    grid = (pl.cdiv(N, tm),)

    def build(weight_buffers):
        est = vmem_estimate(tm, weight_buffers)
        vmem_limit = int(min(max(est * 3 // 2, 32 << 20), limit_cap))
        pm = pl.Buffered(1) if weight_buffers == 1 else None
        return pl.pallas_call(
            _linear_logsoftmax_kernel,
            out_shape=jax.ShapeDtypeStruct((N, C_pad), out_dtype),
            grid_spec=pltpu.PrefetchScalarGridSpec(
                num_scalar_prefetch=0,
                grid=grid,
                in_specs=[
                    pl.BlockSpec((tm, H), lambda i: (i, 0)),        # x row tile
                    pl.BlockSpec((H, C_pad), lambda i: (0, 0),
                                 pipeline_mode=pm),                 # weight (resident)
                    pl.BlockSpec((1, C_pad), lambda i: (0, 0),
                                 pipeline_mode=pm),                 # bias (resident)
                ],
                out_specs=pl.BlockSpec((tm, C_pad), lambda i: (i, 0)),
            ),
            compiler_params=pltpu.CompilerParams(
                dimension_semantics=("parallel",),
                vmem_limit_bytes=vmem_limit),
        )

    try:
        # Grid-invariant weight/bias: single-buffered and DMA'd once.
        out_pad = build(weight_buffers=1)(x, w_t, b_pad)
    except (pltpu.LoweringException, NotImplementedError, ValueError):
        # This jax/mosaic build rejects Buffered(1): fall back to default
        # double-buffering with a vmem_limit recomputed for the larger footprint.
        out_pad = build(weight_buffers=2)(x, w_t, b_pad)

    if num_classes == C_pad:
        return out_pad                      # already lane-dense; no slice copy
    # Drop padded class columns (fuses into the consumer when jitted by caller).
    return out_pad[:, :num_classes]
    # TODO(synk): for LM-head-scale C, switch to a 2-D (row, class-tile) grid that
    # streams (H, tk_c) weight blocks with a two-pass/online logsumexp so the full
    # weight and the (tm, C_pad) f32 logits never live in VMEM at once.


if __name__ == "__main__":
    # Small shapes consistent with the module: hidden_dim=32, num_classes=16, batch=8.
    N, H, C = 8, 32, 16
    key = jax.random.PRNGKey(0)
    kx, kw, kb = jax.random.split(key, 3)

    x = jax.random.normal(kx, (N, H), dtype=jnp.float32)
    # Deterministic parameter init mimicking nn.Linear's uniform(-1/sqrt(H), 1/sqrt(H)).
    bound = 1.0 / jnp.sqrt(jnp.float32(H))
    weight = jax.random.uniform(kw, (C, H), minval=-bound, maxval=bound,
                                dtype=jnp.float32)
    bias = jax.random.uniform(kb, (C,), minval=-bound, maxval=bound,
                              dtype=jnp.float32)

    # One-time parameter packing (module-init analogue); the per-call path only
    # runs the kernel plus (optionally) the class-column slice.
    w_t, b_pad = prepare_my_linear_params(weight, bias)

    out = my_linear_forward(x, w_t, b_pad, num_classes=C)
    out = jax.block_until_ready(out)
    assert out.shape == (N, C)

    # Reference in plain JAX (same math as torch: linear + log_softmax dim=1).
    ref_f32 = jax.nn.log_softmax(x @ weight.T + bias, axis=1)
    # Kernel uses bf16 MXU operands -> relaxed tolerance vs the pure-f32 reference.
    assert jnp.allclose(out, ref_f32, atol=2e-2, rtol=2e-2), "mismatch vs f32 reference"
    # Tight check against a reference applying the same bf16 operand rounding.
    ref_bf = jax.nn.log_softmax(
        (x.astype(jnp.bfloat16).astype(jnp.float32)
         @ weight.T.astype(jnp.bfloat16).astype(jnp.float32)) + bias, axis=1)
    assert jnp.allclose(out, ref_bf, atol=1e-3, rtol=1e-3), "mismatch vs bf16 reference"

    print("KERNEL_OK")
</pallas_src>

<mosaic_0001>
module attributes {stable_mosaic.version = 11 : i64} {
  func.func @_linear_logsoftmax_kernel(%arg0: i32, %arg1: memref<8x32xf32, #tpu.memory_space<vmem>>, %arg2: memref<32x128xbf16, #tpu.memory_space<vmem>>, %arg3: memref<1x128xf32, #tpu.memory_space<vmem>>, %arg4: memref<8x128xf32, #tpu.memory_space<vmem>>) attributes {dimension_semantics = [#tpu.dimension_semantics<parallel>], iteration_bounds = array<i64: 1>, scalar_prefetch = 0 : i64, scratch_operands = 0 : i64, tpu.core_type = #tpu.core_type<tc>, window_params = [{transform_indices = @transform_0, window_bounds = array<i64: 8, 32>}, {pipeline_mode = #tpu.pipeline_mode<synchronous>, transform_indices = @transform_1, window_bounds = array<i64: 32, 128>}, {pipeline_mode = #tpu.pipeline_mode<synchronous>, transform_indices = @transform_2, window_bounds = array<i64: 1, 128>}, {transform_indices = @transform_3, window_bounds = array<i64: 8, 128>}]} {
    %c0 = arith.constant 0 : index
    %c0_0 = arith.constant 0 : index
    %0 = vector.load %arg1[%c0, %c0_0] : memref<8x32xf32, #tpu.memory_space<vmem>>, vector<8x32xf32>
    %1 = arith.truncf %0 : vector<8x32xf32> to vector<8x32xbf16>
    %c0_1 = arith.constant 0 : index
    %c0_2 = arith.constant 0 : index
    %2 = vector.load %arg2[%c0_1, %c0_2] : memref<32x128xbf16, #tpu.memory_space<vmem>>, vector<32x128xbf16>
    %cst = arith.constant dense<0.000000e+00> : vector<8x128xf32>
    %3 = tpu.matmul %1, %2, %cst {dimension_numbers = #tpu.dot_dimension_numbers<[1], [0], [0], [1], [0, 0, 1, 1], [], []>} : vector<8x32xbf16>, vector<32x128xbf16>, vector<8x128xf32> -> vector<8x128xf32>
    %c0_3 = arith.constant 0 : index
    %c0_4 = arith.constant 0 : index
    %4 = vector.load %arg3[%c0_3, %c0_4] : memref<1x128xf32, #tpu.memory_space<vmem>>, vector<1x128xf32>
    %5 = vector.broadcast %4 : vector<1x128xf32> to vector<8x128xf32>
    %6 = arith.addf %3, %5 : vector<8x128xf32>
    %cst_5 = arith.constant dense<0xFF800000> : vector<8xf32>
    %7 = vector.multi_reduction <maximumf>, %6, %cst_5 [1] : vector<8x128xf32> to vector<8xf32>
    %8 = vector.shape_cast %7 : vector<8xf32> to vector<8x1xf32>
    %9 = vector.broadcast %8 : vector<8x1xf32> to vector<8x128xf32>
    %10 = arith.subf %6, %9 : vector<8x128xf32>
    %11 = math.exp %10 : vector<8x128xf32>
    %cst_6 = arith.constant dense<0.000000e+00> : vector<8xf32>
    %12 = vector.multi_reduction <add>, %11, %cst_6 [1] : vector<8x128xf32> to vector<8xf32>
    %13 = vector.shape_cast %12 : vector<8xf32> to vector<8x1xf32>
    %14 = math.log %13 : vector<8x1xf32>
    %15 = vector.broadcast %14 : vector<8x1xf32> to vector<8x128xf32>
    %16 = arith.subf %10, %15 : vector<8x128xf32>
    %c0_7 = arith.constant 0 : index
    %c0_8 = arith.constant 0 : index
    %17 = vector.load %arg4[%c0_7, %c0_8] : memref<8x128xf32, #tpu.memory_space<vmem>>, vector<8x128xf32>
    tpu.vector_store %arg4[%c0_7, %c0_8], %16 {strides = array<i32>} : memref<8x128xf32, #tpu.memory_space<vmem>>, vector<8x128xf32>,
    return
  }
  func.func @transform_0(%arg0: i32) -> (i32, i32) {
    %c0_i32 = arith.constant 0 : i32
    %c0_i32_0 = arith.constant 0 : i32
    return %arg0, %c0_i32 : i32, i32
  }
  func.func @transform_1(%arg0: i32) -> (i32, i32) {
    %c0_i32 = arith.constant 0 : i32
    %c0_i32_0 = arith.constant 0 : i32
    %c0_i32_1 = arith.constant 0 : i32
    return %c0_i32, %c0_i32_0 : i32, i32
  }
  func.func @transform_2(%arg0: i32) -> (i32, i32) {
    %c0_i32 = arith.constant 0 : i32
    %c0_i32_0 = arith.constant 0 : i32
    %c0_i32_1 = arith.constant 0 : i32
    return %c0_i32, %c0_i32_0 : i32, i32
  }
  func.func @transform_3(%arg0: i32) -> (i32, i32) {
    %c0_i32 = arith.constant 0 : i32
    %c0_i32_0 = arith.constant 0 : i32
    return %arg0, %c0_i32 : i32, i32
  }
}

</mosaic_0001>

<llo_original>
// kernel: tpu_custom_call.1
$region0: #{tpu_custom_call.1}
  #allocation0 [shape = 'u32[]', space=smem, size = 0x4, offset = 0x4, fixed_abs, tag = 'smem constant byte address 0x4 - core index']
  #allocation1 [shape = 'u32[144,128]{1,0:T(1,128)}', space=vmem, size = 0x12000, scoped, tag = 'internal scratch']
  %s0 = inlined_call_operand.hbm [shape: f32[8,32], index: 0, kind: input, shape index: {}]
  %s1 = inlined_call_operand.hbm [shape: bf16[32,128], index: 1, kind: input, shape index: {}]
  %s2 = inlined_call_operand.vmem [shape: f32[1,128], index: 2, kind: input, shape index: {}]
  %s3 = inlined_call_operand.hbm [shape: f32[8,128], index: 3, kind: output, shape index: {}]
  %s4 = sld [smem:[#allocation0]]
  $region30: #{tpu_custom_call.1} parent=0
    _
  %s6 = ssub.s32 1, %s4
  %s7 = scalar_select 0, %s6, %s4
  $region1: #{tpu_custom_call.1} parent=0
    #allocation2 [shape = 'u8[4096]{0}', space=vmem, size = 0x1000, scoped, tag = 'input window, operand 0, single buffered']
    #allocation3 [shape = 's32[1]{0}', space=sflag, size = 0x4, scoped, tag = 'scoped memory for tpu_custom_call.1']
    #allocation4 [shape = 's32[1]{0}', space=sflag, size = 0x4, scoped, tag = 'scoped memory for tpu_custom_call.1']
    #allocation5 [shape = 'u8[8192]{0}', space=vmem, size = 0x2000, scoped, tag = 'input window, operand 1, single buffered']
    #allocation6 [shape = 's32[1]{0}', space=sflag, size = 0x4, scoped, tag = 'scoped memory for tpu_custom_call.1']
    #allocation7 [shape = 'u8[4096]{0}', space=vmem, size = 0x1000, scoped, tag = 'output window, operand 0, single buffered']
    %8 = vsyncpa [#allocation3], 0
    %9 = vsyncpa [#allocation6], 0
    %10 = vsyncpa [#allocation4], 0
    // Predicated region
    $region2: #{tpu_custom_call.1} parent=1 // pred_check
      _
    $region3: #{tpu_custom_call.1} parent=1 // pred_check_branch
      %12 = sbr.rel (0) target = $region5
    $region4: #{tpu_custom_call.1} parent=1 // pred_region
      %s14 = ssub.s32 128, 128
      %15 = vsyncadd [#allocation3], %s14
      %s17 = sshll.u32 [#allocation2], 4
      %s18 = int_to_ptr.vmem [resolvable:$true] %s17
      %20 = dma.hbm_to_vmem [thread:$0]  %s0, 128, %s18, [#allocation3]
    $region5: #{tpu_custom_call.1} parent=1 // pred_fallthru
      _
    // Predicated region
    $region6: #{tpu_custom_call.1} parent=1 // pred_check
      _
    $region7: #{tpu_custom_call.1} parent=1 // pred_check_branch
      %22 = sbr.rel (0) target = $region9
    $region8: #{tpu_custom_call.1} parent=1 // pred_region
      %s24 = ssub.s32 256, 256
      %25 = vsyncadd [#allocation6], %s24
      %s26 = sshll.u32 [#allocation5], 4
      %s27 = int_to_ptr.vmem [resolvable:$true] %s26
      %32 = dma.hbm_to_vmem [thread:$0]  %s1, 256, %s27, [#allocation6], 64, 64, 4
    $region9: #{tpu_custom_call.1} parent=1 // pred_fallthru
      _
    // Predicated region
    $region10: #{tpu_custom_call.1} parent=1 // pred_check
      _
    $region11: #{tpu_custom_call.1} parent=1 // pred_check_branch
      %34 = sbr.rel (0) target = $region13
    $region12: #{tpu_custom_call.1} parent=1 // pred_region
      _
    $region13: #{tpu_custom_call.1} parent=1 // pred_fallthru
      _
    // Predicated region
    $region14: #{tpu_custom_call.1} parent=1 // pred_check
      _
    $region15: #{tpu_custom_call.1} parent=1 // pred_check_branch
      %36 = sbr.rel (0) target = $region17
    $region16: #{tpu_custom_call.1} parent=1 // pred_region
      %37 = dma.done [#allocation3], 128
    $region17: #{tpu_custom_call.1} parent=1 // pred_fallthru
      _
    // Predicated region
    $region18: #{tpu_custom_call.1} parent=1 // pred_check
      _
    $region19: #{tpu_custom_call.1} parent=1 // pred_check_branch
      %39 = sbr.rel (0) target = $region21
    $region20: #{tpu_custom_call.1} parent=1 // pred_region
      %40 = dma.done [#allocation6], 256
    $region21: #{tpu_custom_call.1} parent=1 // pred_fallthru
      _
    %v42 = vld [vmem:[#allocation2] sm:$0xff]
    %v43 = vpack.c.bf16 %v42, %v42
    %v44 = vld [vmem:[#allocation5] sm:$0xf]
    %v45 = vld [vmem:[#allocation5 + $0x4] sm:$0xf]
    %v46 = vld [vmem:[#allocation5 + $0x8] sm:$0xf]
    %v47 = vld [vmem:[#allocation5 + $0xc] sm:$0xf]
    %v48 = vld [vmem:[%s2] sm:$0x1]
    %v50 = vlaneseq
    %v51 = vshrl.u32 %v50, 7
    %v52 = vsub.s32 0, %v51
    %v53 = vrot.slane %v48, %v52
    %v59 = vunpack.c.l.b16 %v44
    %v60 = vunpack.c.l.b16 %v45
    %v61 = vunpack.c.l.b16 %v46
    %v62 = vunpack.c.l.b16 %v47
    %v63 = vpack.c.b16 %v60, %v59
    %v64 = vpack.c.b16 %v62, %v61
    %vm67 = vcmask 261120
    %v69 = vsel %vm67, %v43, 0
    %71 = vmatprep.subr.bf16.mxu0 0
    %72 = vmatpush1.bf16.msra.mxu0 %v63
    %73 = vmatprep.subr.bf16.mxu0 0
    %74 = vmatpush1.bf16.msra.mxu0 %v64
    %75 = vmatprep.subr.bf16.mxu0 0
    %76 = vmatpush1.bf16.msra.mxu0 0
    %77 = vmatprep.subr.bf16.mxu0 0
    %78 = vmatpush1.bf16.msra.mxu0 0
    %79 = vmatprep.subr.bf16.mxu0 0
    %80 = vmatpush1.bf16.msra.mxu0 0
    %81 = vmatprep.subr.bf16.mxu0 0
    %82 = vmatpush1.bf16.msra.mxu0 0
    %83 = vmatprep.subr.bf16.mxu0 0
    %84 = vmatpush1.bf16.msra.mxu0 0
    %85 = vmatprep.subr.bf16.mxu0 0
    %86 = vmatpush1.bf16.msra.mxu0 0
    %87 = vmatprep.subr.bf16.mxu0 0
    %88 = vmatpush1.bf16.msra.mxu0 0
    %89 = vmatprep.subr.bf16.mxu0 0
    %90 = vmatpush1.bf16.msra.mxu0 0
    %91 = vmatprep.subr.bf16.mxu0 0
    %92 = vmatpush1.bf16.msra.mxu0 0
    %93 = vmatprep.subr.bf16.mxu0 0
    %94 = vmatpush1.bf16.msra.mxu0 0
    %95 = vmatprep.subr.bf16.mxu0 0
    %96 = vmatpush1.bf16.msra.mxu0 0
    %97 = vmatprep.subr.bf16.mxu0 0
    %98 = vmatpush1.bf16.msra.mxu0 0
    %99 = vmatprep.subr.bf16.mxu0 0
    %100 = vmatpush1.bf16.msra.mxu0 0
    %101 = vmatprep.subr.bf16.mxu0 0
    %102 = vmatpush1.bf16.msra.mxu0 0
    %103 = vmatprep.mubr.bf16.mxu0 0
    %104 = vmatmul.mubr.bf16.gmra.mrb[0].mxu0 %v69
    %v105 = vpop.f32.mrb[0].mxu0
    %v106 = vadd.f32 %v53, %v105
    %v107 = vpop.f32.mrb[0].mxu0
    %v108 = vpop.f32.mrb[0].mxu0
    %v109 = vpop.f32.mrb[0].mxu0
    %110 = vdwg.mxu0
    %111 = vmax.xlane.f32.xlu0 %v106
    %v112 = vpop.xlane.xlu0 %111
    %v113 = vsub.f32 %v106, %v112
    %v114 = vmul.f32 %v113, 1.442695
    %v115 = vpow.pop %v114
    %116 = vadd.xlane.f32.xlu0 %v115
    %v117 = vpop.xlane.xlu0 %116
    %v118 = vlog2.pop %v117
    %v119 = vmul.f32 %v118, 0.6931472
    %v120 = vsub.f32 %v113, %v119
    %121 = vst [vmem:[#allocation7] sm:$0xff] %v120
    // Predicated region
    $region22: #{tpu_custom_call.1} parent=1 // pred_check
      _
    $region23: #{tpu_custom_call.1} parent=1 // pred_check_branch
      %123 = sbr.rel (0) target = $region25
    $region24: #{tpu_custom_call.1} parent=1 // pred_region
      %s125 = ssub.s32 128, 128
      %126 = vsyncadd [#allocation4], %s125
      %s128 = sshll.u32 [#allocation7], 4
      %s129 = int_to_ptr.vmem [resolvable:$true] %s128
      %131 = dma.vmem_to_hbm [thread:$0]  %s129, 128, %s3, [#allocation4]
    $region25: #{tpu_custom_call.1} parent=1 // pred_fallthru
      _
    // Predicated region
    $region26: #{tpu_custom_call.1} parent=1 // pred_check
      _
    $region27: #{tpu_custom_call.1} parent=1 // pred_check_branch
      %133 = sbr.rel (0) target = $region29
    $region28: #{tpu_custom_call.1} parent=1 // pred_region
      %134 = dma.done [#allocation4], 128
    $region29: #{tpu_custom_call.1} parent=1 // pred_fallthru
      _
    %135 = vsyncpa [#allocation3], 1
    %136 = vsyncpa [#allocation6], 1
    %137 = vsyncpa [#allocation4], 1

</llo_original>
